<compile_context>
chip_gen: v5e
topology: v5e:2x2
jax: 0.10.0
libtpu: 0.0.40
codegen_flags: <defaults>
</compile_context>

<pallas_src>
import functools

import jax
import jax.numpy as jnp
from jax import lax
from jax.experimental import pallas as pl
from jax.experimental.pallas import tpu as pltpu

D_IN, D_H1, D_H2, D_OUT = 20, 64, 32, 16

# Batch tile (sweep parameter).  Multiple of 128 so the feature-major output
# stores stay lane-dense; 8192 rows/step moves ~1 MB of HBM per step, which
# amortizes the ~0.35 us per-grid-step overhead on v5e/v6e/v7x.
DEFAULT_TB = 8192


def _round_up(n, m):
    return ((n + m - 1) // m) * m


def _choose_batch_tile(batch, tb):
    """Clamp the batch tile to the lane-rounded batch and, when the batch is
    big enough, ensure the grid has >=2 steps so v7x's second TensorCore gets
    work under dimension_semantics=("parallel",)."""
    tb_eff = min(tb, _round_up(batch, 128))
    if batch > 128 and pl.cdiv(batch, tb_eff) < 2:
        tb_eff = _round_up(pl.cdiv(batch, 2), 128)
    return tb_eff


def _default_act_dtype():
    # v6e/v7x have bf16 VPU paths -> bf16 bias-add/ReLU halves VALU vreg ops
    # and temp traffic.  v5e has no bf16 VPU, so keep activations in f32.
    try:
        kind = jax.devices()[0].device_kind.lower()
    except Exception:
        kind = ""
    return jnp.float32 if "v5" in kind else jnp.bfloat16


def _nest_mlp_kernel(x_ref, w1_ref, b1_ref, w2_ref, b2_ref, w3_ref, b3_ref,
                     out_ref, *, act_dtype):
    # x block arrives batch-major (tb, 20) f32 straight from HBM (no wrapper
    # transpose/cast/pad passes).  Everything downstream is feature-major, so
    # bias adds, ReLUs and the output store are lane-dense along the batch.
    x = x_ref[...].astype(jnp.bfloat16)                        # (tb, 20)

    # Layer 1: Linear(20, 64).  A @ B^T form (contract the last dim of both
    # operands) -> (64, tb).  MXU matmul, f32 accumulate.
    a1 = lax.dot_general(w1_ref[...], x, (((1,), (1,)), ((), ())),
                         preferred_element_type=jnp.float32)
    h1 = jnp.maximum(a1.astype(act_dtype) + b1_ref[...], 0).astype(jnp.bfloat16)

    # Layer 2: Linear(64, 32) + ReLU.
    a2 = jnp.dot(w2_ref[...], h1, preferred_element_type=jnp.float32)
    h2 = jnp.maximum(a2.astype(act_dtype) + b2_ref[...], 0).astype(jnp.bfloat16)

    # Layer 3: Linear(32, 16) -- bias added in f32, lane-dense f32 store.
    a3 = jnp.dot(w3_ref[...], h2, preferred_element_type=jnp.float32)
    out_ref[...] = (a3 + b3_ref[...]).astype(out_ref.dtype)    # (16, tb)


def nest_mlp_feature_major(x, params, *, tb=DEFAULT_TB, act_dtype=None):
    """x: (B, 20) float.  Returns the feature-major result (16, B) float32.
    Consumers that can take feature-major output should use this directly;
    `nest_mlp` adds the (B, 16) transpose for parity with the PyTorch module."""
    if act_dtype is None:
        act_dtype = _default_act_dtype()

    B = x.shape[0]
    tb_eff = _choose_batch_tile(B, tb)
    n_tiles = pl.cdiv(B, tb_eff)

    w1, w2, w3 = params["w1"], params["w2"], params["w3"]
    # Biases are tiny: cast once to the activation dtype (b3 stays f32 -- it
    # is added to the f32 accumulator right before the f32 output store).
    b1 = params["b1"].astype(act_dtype)
    b2 = params["b2"].astype(act_dtype)
    b3 = params["b3"].astype(jnp.float32)

    resident = lambda arr: pl.BlockSpec(arr.shape, lambda i: (0, 0))

    flops = 2 * B * (D_IN * D_H1 + D_H1 * D_H2 + D_H2 * D_OUT)
    bytes_accessed = (4 * B * D_IN                                  # x (f32)
                      + 4 * B * D_OUT                               # out (f32)
                      + 2 * (D_IN * D_H1 + D_H1 * D_H2 + D_H2 * D_OUT)  # weights
                      + 4 * (D_H1 + D_H2 + D_OUT))                  # biases

    kernel = functools.partial(_nest_mlp_kernel, act_dtype=act_dtype)

    return pl.pallas_call(
        kernel,
        out_shape=jax.ShapeDtypeStruct((D_OUT, B), jnp.float32),
        grid=(n_tiles,),
        in_specs=[
            pl.BlockSpec((tb_eff, D_IN), lambda i: (i, 0)),   # x tile advances
            resident(w1), resident(b1),                        # weights/biases
            resident(w2), resident(b2),                        # stay VMEM-resident
            resident(w3), resident(b3),
        ],
        out_specs=pl.BlockSpec((D_OUT, tb_eff), lambda i: (0, i)),
        compiler_params=pltpu.CompilerParams(
            dimension_semantics=("parallel",),
            vmem_limit_bytes=32 * 1024 * 1024,
        ),
        cost_estimate=pl.CostEstimate(
            flops=flops, transcendentals=0, bytes_accessed=bytes_accessed),
    )(x, w1, b1, w2, b2, w3, b3)


def nest_mlp(x, params, *, tb=DEFAULT_TB, act_dtype=None):
    """(B, 20) -> (B, 16), matching the PyTorch module's layout.  The final
    transpose is layout plumbing only; fused consumers should prefer
    nest_mlp_feature_major to skip this HBM round-trip."""
    return nest_mlp_feature_major(x, params, tb=tb, act_dtype=act_dtype).T


def init_params(key):
    """Deterministic init mimicking PyTorch nn.Linear default
    (uniform(-1/sqrt(fan_in), 1/sqrt(fan_in))).
    Weights stored (out, in) bf16 for the MXU; biases (out, 1) f32."""
    def linear(k, fan_in, fan_out):
        kw, kb = jax.random.split(k)
        bound = 1.0 / jnp.sqrt(fan_in)
        w = jax.random.uniform(kw, (fan_out, fan_in), jnp.float32, -bound, bound)
        b = jax.random.uniform(kb, (fan_out, 1), jnp.float32, -bound, bound)
        return w.astype(jnp.bfloat16), b

    k1, k2, k3 = jax.random.split(key, 3)
    w1, b1 = linear(k1, D_IN, D_H1)
    w2, b2 = linear(k2, D_H1, D_H2)
    w3, b3 = linear(k3, D_H2, D_OUT)
    return {"w1": w1, "b1": b1, "w2": w2, "b2": b2, "w3": w3, "b3": b3}


def nest_mlp_ref(x, p, act_dtype):
    """Pure-JAX reference using the identical bf16-operand / f32-accumulate /
    act_dtype-activation recipe as the kernel."""
    xb = x.astype(jnp.bfloat16)
    a1 = jnp.dot(xb, p["w1"].T, preferred_element_type=jnp.float32)
    h1 = jnp.maximum(a1.astype(act_dtype) + p["b1"].T.astype(act_dtype),
                     0).astype(jnp.bfloat16)
    a2 = jnp.dot(h1, p["w2"].T, preferred_element_type=jnp.float32)
    h2 = jnp.maximum(a2.astype(act_dtype) + p["b2"].T.astype(act_dtype),
                     0).astype(jnp.bfloat16)
    a3 = jnp.dot(h2, p["w3"].T, preferred_element_type=jnp.float32)
    return a3 + p["b3"].T.astype(jnp.float32)


if __name__ == "__main__":
    key = jax.random.PRNGKey(0)
    kx, kp = jax.random.split(key)

    # matches `X = torch.rand(2, 20)`
    x = jax.random.uniform(kx, (2, D_IN), jnp.float32)
    params = init_params(kp)

    act_dtype = _default_act_dtype()
    out = jax.block_until_ready(nest_mlp(x, params, act_dtype=act_dtype))
    ref = nest_mlp_ref(x, params, act_dtype)

    assert out.shape == (2, D_OUT), out.shape
    assert jnp.allclose(out, ref, atol=3e-2, rtol=3e-2), \
        float(jnp.max(jnp.abs(out - ref)))

    print("KERNEL_OK")
</pallas_src>

<mosaic_0001>
module attributes {stable_mosaic.version = 11 : i64} {
  func.func @_nest_mlp_kernel(%arg0: i32, %arg1: memref<128x20xf32, #tpu.memory_space<vmem>>, %arg2: memref<64x20xbf16, #tpu.memory_space<vmem>>, %arg3: memref<64x1xbf16, #tpu.memory_space<vmem>>, %arg4: memref<32x64xbf16, #tpu.memory_space<vmem>>, %arg5: memref<32x1xbf16, #tpu.memory_space<vmem>>, %arg6: memref<16x32xbf16, #tpu.memory_space<vmem>>, %arg7: memref<16x1xf32, #tpu.memory_space<vmem>>, %arg8: memref<16x128xf32, #tpu.memory_space<vmem>>) attributes {dimension_semantics = [#tpu.dimension_semantics<parallel>], iteration_bounds = array<i64: 1>, scalar_prefetch = 0 : i64, scratch_operands = 0 : i64, tpu.core_type = #tpu.core_type<tc>, window_params = [{transform_indices = @transform_0, window_bounds = array<i64: 128, 20>}, {pipeline_mode = #tpu.pipeline_mode<synchronous>, transform_indices = @transform_1, window_bounds = array<i64: 64, 20>}, {pipeline_mode = #tpu.pipeline_mode<synchronous>, transform_indices = @transform_2, window_bounds = array<i64: 64, 1>}, {pipeline_mode = #tpu.pipeline_mode<synchronous>, transform_indices = @transform_3, window_bounds = array<i64: 32, 64>}, {pipeline_mode = #tpu.pipeline_mode<synchronous>, transform_indices = @transform_4, window_bounds = array<i64: 32, 1>}, {pipeline_mode = #tpu.pipeline_mode<synchronous>, transform_indices = @transform_5, window_bounds = array<i64: 16, 32>}, {pipeline_mode = #tpu.pipeline_mode<synchronous>, transform_indices = @transform_6, window_bounds = array<i64: 16, 1>}, {transform_indices = @transform_7, window_bounds = array<i64: 16, 128>}]} {
    %c0 = arith.constant 0 : index
    %c0_0 = arith.constant 0 : index
    %0 = vector.load %arg1[%c0, %c0_0] : memref<128x20xf32, #tpu.memory_space<vmem>>, vector<128x20xf32>
    %1 = arith.truncf %0 : vector<128x20xf32> to vector<128x20xbf16>
    %c0_1 = arith.constant 0 : index
    %c0_2 = arith.constant 0 : index
    %2 = vector.load %arg2[%c0_1, %c0_2] : memref<64x20xbf16, #tpu.memory_space<vmem>>, vector<64x20xbf16>
    %cst = arith.constant dense<0.000000e+00> : vector<64x128xf32>
    %3 = tpu.matmul %2, %1, %cst {dimension_numbers = #tpu.dot_dimension_numbers<[1], [1], [0], [0], [0, 0, 1, 0], [], []>} : vector<64x20xbf16>, vector<128x20xbf16>, vector<64x128xf32> -> vector<64x128xf32>
    %4 = arith.truncf %3 : vector<64x128xf32> to vector<64x128xbf16>
    %c0_3 = arith.constant 0 : index
    %c0_4 = arith.constant 0 : index
    %5 = vector.load %arg3[%c0_3, %c0_4] : memref<64x1xbf16, #tpu.memory_space<vmem>>, vector<64x1xbf16>
    %6 = vector.broadcast %5 : vector<64x1xbf16> to vector<64x128xbf16>
    %7 = arith.addf %4, %6 : vector<64x128xbf16>
    %cst_5 = arith.constant 0.000000e+00 : bf16
    %8 = vector.broadcast %cst_5 : bf16 to vector<64x128xbf16>
    %9 = arith.maximumf %7, %8 : vector<64x128xbf16>
    %c0_6 = arith.constant 0 : index
    %c0_7 = arith.constant 0 : index
    %10 = vector.load %arg4[%c0_6, %c0_7] : memref<32x64xbf16, #tpu.memory_space<vmem>>, vector<32x64xbf16>
    %cst_8 = arith.constant dense<0.000000e+00> : vector<32x128xf32>
    %11 = tpu.matmul %10, %9, %cst_8 {dimension_numbers = #tpu.dot_dimension_numbers<[1], [0], [0], [1], [0, 0, 1, 1], [], []>} : vector<32x64xbf16>, vector<64x128xbf16>, vector<32x128xf32> -> vector<32x128xf32>
    %12 = arith.truncf %11 : vector<32x128xf32> to vector<32x128xbf16>
    %c0_9 = arith.constant 0 : index
    %c0_10 = arith.constant 0 : index
    %13 = vector.load %arg5[%c0_9, %c0_10] : memref<32x1xbf16, #tpu.memory_space<vmem>>, vector<32x1xbf16>
    %14 = vector.broadcast %13 : vector<32x1xbf16> to vector<32x128xbf16>
    %15 = arith.addf %12, %14 : vector<32x128xbf16>
    %cst_11 = arith.constant 0.000000e+00 : bf16
    %16 = vector.broadcast %cst_11 : bf16 to vector<32x128xbf16>
    %17 = arith.maximumf %15, %16 : vector<32x128xbf16>
    %c0_12 = arith.constant 0 : index
    %c0_13 = arith.constant 0 : index
    %18 = vector.load %arg6[%c0_12, %c0_13] : memref<16x32xbf16, #tpu.memory_space<vmem>>, vector<16x32xbf16>
    %cst_14 = arith.constant dense<0.000000e+00> : vector<16x128xf32>
    %19 = tpu.matmul %18, %17, %cst_14 {dimension_numbers = #tpu.dot_dimension_numbers<[1], [0], [0], [1], [0, 0, 1, 1], [], []>} : vector<16x32xbf16>, vector<32x128xbf16>, vector<16x128xf32> -> vector<16x128xf32>
    %c0_15 = arith.constant 0 : index
    %c0_16 = arith.constant 0 : index
    %20 = vector.load %arg7[%c0_15, %c0_16] : memref<16x1xf32, #tpu.memory_space<vmem>>, vector<16x1xf32>
    %21 = vector.broadcast %20 : vector<16x1xf32> to vector<16x128xf32>
    %22 = arith.addf %19, %21 : vector<16x128xf32>
    %c0_17 = arith.constant 0 : index
    %c0_18 = arith.constant 0 : index
    %23 = vector.load %arg8[%c0_17, %c0_18] : memref<16x128xf32, #tpu.memory_space<vmem>>, vector<16x128xf32>
    tpu.vector_store %arg8[%c0_17, %c0_18], %22 {strides = array<i32>} : memref<16x128xf32, #tpu.memory_space<vmem>>, vector<16x128xf32>,
    return
  }
  func.func @transform_0(%arg0: i32) -> (i32, i32) {
    %c0_i32 = arith.constant 0 : i32
    %c0_i32_0 = arith.constant 0 : i32
    return %arg0, %c0_i32 : i32, i32
  }
  func.func @transform_1(%arg0: i32) -> (i32, i32) {
    %c0_i32 = arith.constant 0 : i32
    %c0_i32_0 = arith.constant 0 : i32
    %c0_i32_1 = arith.constant 0 : i32
    return %c0_i32, %c0_i32_0 : i32, i32
  }
  func.func @transform_2(%arg0: i32) -> (i32, i32) {
    %c0_i32 = arith.constant 0 : i32
    %c0_i32_0 = arith.constant 0 : i32
    %c0_i32_1 = arith.constant 0 : i32
    return %c0_i32, %c0_i32_0 : i32, i32
  }
  func.func @transform_3(%arg0: i32) -> (i32, i32) {
    %c0_i32 = arith.constant 0 : i32
    %c0_i32_0 = arith.constant 0 : i32
    %c0_i32_1 = arith.constant 0 : i32
    return %c0_i32, %c0_i32_0 : i32, i32
  }
  func.func @transform_4(%arg0: i32) -> (i32, i32) {
    %c0_i32 = arith.constant 0 : i32
    %c0_i32_0 = arith.constant 0 : i32
    %c0_i32_1 = arith.constant 0 : i32
    return %c0_i32, %c0_i32_0 : i32, i32
  }
  func.func @transform_5(%arg0: i32) -> (i32, i32) {
    %c0_i32 = arith.constant 0 : i32
    %c0_i32_0 = arith.constant 0 : i32
    %c0_i32_1 = arith.constant 0 : i32
    return %c0_i32, %c0_i32_0 : i32, i32
  }
  func.func @transform_6(%arg0: i32) -> (i32, i32) {
    %c0_i32 = arith.constant 0 : i32
    %c0_i32_0 = arith.constant 0 : i32
    %c0_i32_1 = arith.constant 0 : i32
    return %c0_i32, %c0_i32_0 : i32, i32
  }
  func.func @transform_7(%arg0: i32) -> (i32, i32) {
    %c0_i32 = arith.constant 0 : i32
    %c0_i32_0 = arith.constant 0 : i32
    return %c0_i32, %arg0 : i32, i32
  }
}

</mosaic_0001>

<llo_original>
// kernel: tpu_custom_call.1
$region0: #{tpu_custom_call.1}
  #allocation0 [shape = 'u32[]', space=smem, size = 0x4, offset = 0x4, fixed_abs, tag = 'smem constant byte address 0x4 - core index']
  #allocation1 [shape = 'u32[72,128]{1,0:T(1,128)}', space=vmem, size = 0x9000, scoped, tag = 'internal scratch']
  %s0 = inlined_call_operand.vmem [shape: f32[2,20], index: 0, kind: input, shape index: {}]
  %s1 = inlined_call_operand.vmem [shape: bf16[64,20], index: 1, kind: input, shape index: {}]
  %s2 = inlined_call_operand.vmem [shape: bf16[64,1], index: 2, kind: input, shape index: {}]
  %s3 = inlined_call_operand.vmem [shape: bf16[32,64], index: 3, kind: input, shape index: {}]
  %s4 = inlined_call_operand.vmem [shape: bf16[32,1], index: 4, kind: input, shape index: {}]
  %s5 = inlined_call_operand.vmem [shape: bf16[16,32], index: 5, kind: input, shape index: {}]
  %s6 = inlined_call_operand.vmem [shape: f32[16,1], index: 6, kind: input, shape index: {}]
  %s7 = inlined_call_operand.vmem [shape: f32[16,2], index: 7, kind: output, shape index: {}]
  %s8 = sld [smem:[#allocation0]]
  $region38: #{tpu_custom_call.1} parent=0
    _
  %s10 = ssub.s32 1, %s8
  %s11 = scalar_select 0, %s10, %s8
  // Predicated region
  $region2: #{tpu_custom_call.1} parent=0 // pred_check
    _
  $region3: #{tpu_custom_call.1} parent=0 // pred_check_branch
    %13 = sbr.rel (0) target = $region5
  $region4: #{tpu_custom_call.1} parent=0 // pred_region
    _
  $region5: #{tpu_custom_call.1} parent=0 // pred_fallthru
    _
  // Predicated region
  $region6: #{tpu_custom_call.1} parent=0 // pred_check
    _
  $region7: #{tpu_custom_call.1} parent=0 // pred_check_branch
    %15 = sbr.rel (0) target = $region9
  $region8: #{tpu_custom_call.1} parent=0 // pred_region
    _
  $region9: #{tpu_custom_call.1} parent=0 // pred_fallthru
    _
  // Predicated region
  $region10: #{tpu_custom_call.1} parent=0 // pred_check
    _
  $region11: #{tpu_custom_call.1} parent=0 // pred_check_branch
    %17 = sbr.rel (0) target = $region13
  $region12: #{tpu_custom_call.1} parent=0 // pred_region
    _
  $region13: #{tpu_custom_call.1} parent=0 // pred_fallthru
    _
  // Predicated region
  $region14: #{tpu_custom_call.1} parent=0 // pred_check
    _
  $region15: #{tpu_custom_call.1} parent=0 // pred_check_branch
    %19 = sbr.rel (0) target = $region17
  $region16: #{tpu_custom_call.1} parent=0 // pred_region
    _
  $region17: #{tpu_custom_call.1} parent=0 // pred_fallthru
    _
  // Predicated region
  $region18: #{tpu_custom_call.1} parent=0 // pred_check
    _
  $region19: #{tpu_custom_call.1} parent=0 // pred_check_branch
    %21 = sbr.rel (0) target = $region21
  $region20: #{tpu_custom_call.1} parent=0 // pred_region
    _
  $region21: #{tpu_custom_call.1} parent=0 // pred_fallthru
    _
  // Predicated region
  $region22: #{tpu_custom_call.1} parent=0 // pred_check
    _
  $region23: #{tpu_custom_call.1} parent=0 // pred_check_branch
    %23 = sbr.rel (0) target = $region25
  $region24: #{tpu_custom_call.1} parent=0 // pred_region
    _
  $region25: #{tpu_custom_call.1} parent=0 // pred_fallthru
    _
  // Predicated region
  $region26: #{tpu_custom_call.1} parent=0 // pred_check
    _
  $region27: #{tpu_custom_call.1} parent=0 // pred_check_branch
    %25 = sbr.rel (0) target = $region29
  $region28: #{tpu_custom_call.1} parent=0 // pred_region
    _
  $region29: #{tpu_custom_call.1} parent=0 // pred_fallthru
    _
  %v27 = vld [vmem:[%s0] sm:$0xff]
  %v28 = vld [vmem:[%s0 + $0x8] sm:$0xff]
  %v29 = vld [vmem:[%s0 + $0x10] sm:$0xff]
  %v30 = vld [vmem:[%s0 + $0x18] sm:$0xff]
  %v31 = vld [vmem:[%s0 + $0x20] sm:$0xff]
  %v32 = vld [vmem:[%s0 + $0x28] sm:$0xff]
  %v33 = vld [vmem:[%s0 + $0x30] sm:$0xff]
  %v34 = vld [vmem:[%s0 + $0x38] sm:$0xff]
  %v35 = vld [vmem:[%s0 + $0x40] sm:$0xff]
  %v36 = vld [vmem:[%s0 + $0x48] sm:$0xff]
  %v37 = vld [vmem:[%s0 + $0x50] sm:$0xff]
  %v38 = vld [vmem:[%s0 + $0x58] sm:$0xff]
  %v39 = vld [vmem:[%s0 + $0x60] sm:$0xff]
  %v40 = vld [vmem:[%s0 + $0x68] sm:$0xff]
  %v41 = vld [vmem:[%s0 + $0x70] sm:$0xff]
  %v42 = vld [vmem:[%s0 + $0x78] sm:$0xff]
  %v43 = vpack.c.bf16 %v28, %v27
  %v44 = vpack.c.bf16 %v30, %v29
  %v45 = vpack.c.bf16 %v32, %v31
  %v46 = vpack.c.bf16 %v34, %v33
  %v47 = vpack.c.bf16 %v36, %v35
  %v48 = vpack.c.bf16 %v38, %v37
  %v49 = vpack.c.bf16 %v40, %v39
  %v50 = vpack.c.bf16 %v42, %v41
  %v51 = vld [vmem:[%s1] sm:$0xf]
  %v52 = vld [vmem:[%s1 + $0x4] sm:$0xf]
  %v53 = vld [vmem:[%s1 + $0x8] sm:$0xf]
  %v54 = vld [vmem:[%s1 + $0xc] sm:$0xf]
  %v55 = vld [vmem:[%s1 + $0x10] sm:$0xf]
  %v56 = vld [vmem:[%s1 + $0x14] sm:$0xf]
  %v57 = vld [vmem:[%s1 + $0x18] sm:$0xf]
  %v58 = vld [vmem:[%s1 + $0x1c] sm:$0xf]
  %v67 = vunpack.c.l.b16 %v51
  %v68 = vunpack.c.l.b16 %v52
  %v69 = vunpack.c.l.b16 %v53
  %v70 = vunpack.c.l.b16 %v54
  %v71 = vunpack.c.l.b16 %v55
  %v72 = vunpack.c.l.b16 %v56
  %v73 = vunpack.c.l.b16 %v57
  %v74 = vunpack.c.l.b16 %v58
  %v75 = vpack.c.b16 %v68, %v67
  %v76 = vpack.c.b16 %v70, %v69
  %v77 = vpack.c.b16 %v72, %v71
  %v78 = vpack.c.b16 %v74, %v73
  %vm79 = vcmask 162816
  %v81 = vsel %vm79, %v75, 0
  %v84 = vsel %vm79, %v76, 0
  %v87 = vsel %vm79, %v77, 0
  %v90 = vsel %vm79, %v78, 0
  %v93 = vsel %vm79, %v43, 0
  %v96 = vsel %vm79, %v44, 0
  %v99 = vsel %vm79, %v45, 0
  %v102 = vsel %vm79, %v46, 0
  %v105 = vsel %vm79, %v47, 0
  %v108 = vsel %vm79, %v48, 0
  %v111 = vsel %vm79, %v49, 0
  %v114 = vsel %vm79, %v50, 0
  %116 = vmatpush.bf16.xpose.msra.mxu0 %v114
  %117 = vmatpush.bf16.xpose.msra.mxu0 %v111
  %118 = vmatpush.bf16.xpose.msra.mxu0 %v108
  %119 = vmatpush.bf16.xpose.msra.mxu0 %v105
  %120 = vmatpush.bf16.xpose.msra.mxu0 %v102
  %121 = vmatpush.bf16.xpose.msra.mxu0 %v99
  %122 = vmatpush.bf16.xpose.msra.mxu0 %v96
  %123 = vmatpush.bf16.xpose.msra.mxu0 %v93
  %124 = vmatmul.bf16.gmra.mxu0 %v81
  %v125 = vpop.f32.mrf.mxu0
  %v126 = vadd.f32 0.0, %v125
  %v127 = vpop.f32.mrf.mxu0
  %v128 = vadd.f32 0.0, %v127
  %129 = vmatmul.bf16.gmra.mxu0 %v84
  %v130 = vpop.f32.mrf.mxu0
  %v131 = vadd.f32 0.0, %v130
  %v132 = vpop.f32.mrf.mxu0
  %v133 = vadd.f32 0.0, %v132
  %134 = vmatmul.bf16.gmra.mxu0 %v87
  %v135 = vpop.f32.mrf.mxu0
  %v136 = vadd.f32 0.0, %v135
  %v137 = vpop.f32.mrf.mxu0
  %v138 = vadd.f32 0.0, %v137
  %139 = vmatmul.bf16.gmra.mxu0 %v90
  %v140 = vpop.f32.mrf.mxu0
  %v141 = vadd.f32 0.0, %v140
  %v142 = vpop.f32.mrf.mxu0
  %v143 = vadd.f32 0.0, %v142
  %144 = vdwg.mxu0
  %v145 = vpack.c.bf16 %v126, %v126
  %v146 = vpack.c.bf16 %v128, %v128
  %v147 = vpack.c.bf16 %v131, %v131
  %v148 = vpack.c.bf16 %v133, %v133
  %v149 = vpack.c.bf16 %v136, %v136
  %v150 = vpack.c.bf16 %v138, %v138
  %v151 = vpack.c.bf16 %v141, %v141
  %v152 = vpack.c.bf16 %v143, %v143
  %v153 = vld [vmem:[%s2] sm:$0xf]
  %v154 = vld [vmem:[%s2 + $0x4] sm:$0xf]
  %v155 = vld [vmem:[%s2 + $0x8] sm:$0xf]
  %v156 = vld [vmem:[%s2 + $0xc] sm:$0xf]
  %v157 = vld [vmem:[%s2 + $0x10] sm:$0xf]
  %v158 = vld [vmem:[%s2 + $0x14] sm:$0xf]
  %v159 = vld [vmem:[%s2 + $0x18] sm:$0xf]
  %v160 = vld [vmem:[%s2 + $0x1c] sm:$0xf]
  %162 = vset.pattern.permute.xlu0 0
  %163 = vperm.xlu0 %162, %v153
  %v164 = vpop.permute.xlu0 %163
  %v167 = vunpack.c.l.s4 839922192
  %v168 = vunpack.c.0.s8 %v167
  %v169 = vperm.slane %v164, %v168
  %171 = vset.pattern.permute.xlu0 0
  %172 = vperm.xlu0 %171, %v154
  %v173 = vpop.permute.xlu0 %172
  %v176 = vunpack.c.l.s4 839922192
  %v177 = vunpack.c.0.s8 %v176
  %v178 = vperm.slane %v173, %v177
  %180 = vset.pattern.permute.xlu0 0
  %181 = vperm.xlu0 %180, %v155
  %v182 = vpop.permute.xlu0 %181
  %v185 = vunpack.c.l.s4 839922192
  %v186 = vunpack.c.0.s8 %v185
  %v187 = vperm.slane %v182, %v186
  %189 = vset.pattern.permute.xlu0 0
  %190 = vperm.xlu0 %189, %v156
  %v191 = vpop.permute.xlu0 %190
  %v194 = vunpack.c.l.s4 839922192
  %v195 = vunpack.c.0.s8 %v194
  %v196 = vperm.slane %v191, %v195
  %198 = vset.pattern.permute.xlu0 0
  %199 = vperm.xlu0 %198, %v157
  %v200 = vpop.permute.xlu0 %199
  %v203 = vunpack.c.l.s4 839922192
  %v204 = vunpack.c.0.s8 %v203
  %v205 = vperm.slane %v200, %v204
  %207 = vset.pattern.permute.xlu0 0
  %208 = vperm.xlu0 %207, %v158
  %v209 = vpop.permute.xlu0 %208
  %v212 = vunpack.c.l.s4 839922192
  %v213 = vunpack.c.0.s8 %v212
  %v214 = vperm.slane %v209, %v213
  %216 = vset.pattern.permute.xlu0 0
  %217 = vperm.xlu0 %216, %v159
  %v218 = vpop.permute.xlu0 %217
  %v221 = vunpack.c.l.s4 839922192
  %v222 = vunpack.c.0.s8 %v221
  %v223 = vperm.slane %v218, %v222
  %225 = vset.pattern.permute.xlu0 0
  %226 = vperm.xlu0 %225, %v160
  %v227 = vpop.permute.xlu0 %226
  %v230 = vunpack.c.l.s4 839922192
  %v231 = vunpack.c.0.s8 %v230
  %v232 = vperm.slane %v227, %v231
  %v233 = vunpack.c.l.bf16 %v145
  %v234 = vunpack.c.l.bf16 %v146
  %v235 = vunpack.c.l.bf16 %v147
  %v236 = vunpack.c.l.bf16 %v148
  %v237 = vunpack.c.l.bf16 %v149
  %v238 = vunpack.c.l.bf16 %v150
  %v239 = vunpack.c.l.bf16 %v151
  %v240 = vunpack.c.l.bf16 %v152
  %v241 = vunpack.c.l.bf16 %v169
  %v242 = vunpack.c.l.bf16 %v178
  %v243 = vunpack.c.l.bf16 %v187
  %v244 = vunpack.c.l.bf16 %v196
  %v245 = vunpack.c.l.bf16 %v205
  %v246 = vunpack.c.l.bf16 %v214
  %v247 = vunpack.c.l.bf16 %v223
  %v248 = vunpack.c.l.bf16 %v232
  %v249 = vadd.f32 %v233, %v241
  %v250 = vadd.f32 %v234, %v242
  %v251 = vadd.f32 %v235, %v243
  %v252 = vadd.f32 %v236, %v244
  %v253 = vadd.f32 %v237, %v245
  %v254 = vadd.f32 %v238, %v246
  %v255 = vadd.f32 %v239, %v247
  %v256 = vadd.f32 %v240, %v248
  %v257 = vpack.c.bf16 %v249, %v249
  %v258 = vpack.c.bf16 %v250, %v250
  %v259 = vpack.c.bf16 %v251, %v251
  %v260 = vpack.c.bf16 %v252, %v252
  %v261 = vpack.c.bf16 %v253, %v253
  %v262 = vpack.c.bf16 %v254, %v254
  %v263 = vpack.c.bf16 %v255, %v255
  %v264 = vpack.c.bf16 %v256, %v256
  %v265 = vunpack.c.l.bf16 %v257
  %v266 = vunpack.c.l.bf16 %v258
  %v267 = vunpack.c.l.bf16 %v259
  %v268 = vunpack.c.l.bf16 %v260
  %v269 = vunpack.c.l.bf16 %v261
  %v270 = vunpack.c.l.bf16 %v262
  %v271 = vunpack.c.l.bf16 %v263
  %v272 = vunpack.c.l.bf16 %v264
  %v273 = vmax.f32 %v265, 0.0
  %v274 = vmax.f32 %v266, 0.0
  %v275 = vmax.f32 %v267, 0.0
  %v276 = vmax.f32 %v268, 0.0
  %v277 = vmax.f32 %v269, 0.0
  %v278 = vmax.f32 %v270, 0.0
  %v279 = vmax.f32 %v271, 0.0
  %v280 = vmax.f32 %v272, 0.0
  %v281 = vpack.c.bf16 %v274, %v273
  %v282 = vpack.c.bf16 %v276, %v275
  %v283 = vpack.c.bf16 %v278, %v277
  %v284 = vpack.c.bf16 %v280, %v279
  %v285 = vld [vmem:[%s3] sm:$0xf]
  %v286 = vld [vmem:[%s3 + $0x4] sm:$0xf]
  %v287 = vld [vmem:[%s3 + $0x8] sm:$0xf]
  %v288 = vld [vmem:[%s3 + $0xc] sm:$0xf]
  %v293 = vunpack.c.l.b16 %v285
  %v294 = vunpack.c.l.b16 %v286
  %v295 = vunpack.c.l.b16 %v287
  %v296 = vunpack.c.l.b16 %v288
  %v297 = vpack.c.b16 %v294, %v293
  %v298 = vpack.c.b16 %v296, %v295
  %vm299 = vcmask 523264
  %v301 = vsel %vm299, %v297, 0
  %v304 = vsel %vm299, %v298, 0
  %306 = vmatpush.bf16.msra.mxu0 0
  %307 = vmatpush.bf16.msra.mxu0 0
  %308 = vmatpush.bf16.msra.mxu0 0
  %309 = vmatpush.bf16.msra.mxu0 0
  %310 = vmatpush.bf16.msra.mxu0 %v284
  %311 = vmatpush.bf16.msra.mxu0 %v283
  %312 = vmatpush.bf16.msra.mxu0 %v282
  %313 = vmatpush.bf16.msra.mxu0 %v281
  %314 = vmatmul.bf16.gmra.mxu0 %v301
  %v315 = vpop.f32.mrf.mxu0
  %v316 = vadd.f32 0.0, %v315
  %v317 = vpop.f32.mrf.mxu0
  %v318 = vadd.f32 0.0, %v317
  %319 = vmatmul.bf16.gmra.mxu0 %v304
  %v320 = vpop.f32.mrf.mxu0
  %v321 = vadd.f32 0.0, %v320
  %v322 = vpop.f32.mrf.mxu0
  %v323 = vadd.f32 0.0, %v322
  %324 = vdwg.mxu0
  %v325 = vpack.c.bf16 %v316, %v316
  %v326 = vpack.c.bf16 %v318, %v318
  %v327 = vpack.c.bf16 %v321, %v321
  %v328 = vpack.c.bf16 %v323, %v323
  %v329 = vld [vmem:[%s4] sm:$0xf]
  %v330 = vld [vmem:[%s4 + $0x4] sm:$0xf]
  %v331 = vld [vmem:[%s4 + $0x8] sm:$0xf]
  %v332 = vld [vmem:[%s4 + $0xc] sm:$0xf]
  %334 = vset.pattern.permute.xlu0 0
  %335 = vperm.xlu0 %334, %v329
  %v336 = vpop.permute.xlu0 %335
  %v339 = vunpack.c.l.s4 839922192
  %v340 = vunpack.c.0.s8 %v339
  %v341 = vperm.slane %v336, %v340
  %343 = vset.pattern.permute.xlu0 0
  %344 = vperm.xlu0 %343, %v330
  %v345 = vpop.permute.xlu0 %344
  %v348 = vunpack.c.l.s4 839922192
  %v349 = vunpack.c.0.s8 %v348
  %v350 = vperm.slane %v345, %v349
  %352 = vset.pattern.permute.xlu0 0
  %353 = vperm.xlu0 %352, %v331
  %v354 = vpop.permute.xlu0 %353
  %v357 = vunpack.c.l.s4 839922192
  %v358 = vunpack.c.0.s8 %v357
  %v359 = vperm.slane %v354, %v358
  %361 = vset.pattern.permute.xlu0 0
  %362 = vperm.xlu0 %361, %v332
  %v363 = vpop.permute.xlu0 %362
  %v366 = vunpack.c.l.s4 839922192
  %v367 = vunpack.c.0.s8 %v366
  %v368 = vperm.slane %v363, %v367
  %v369 = vunpack.c.l.bf16 %v325
  %v370 = vunpack.c.l.bf16 %v326
  %v371 = vunpack.c.l.bf16 %v327
  %v372 = vunpack.c.l.bf16 %v328
  %v373 = vunpack.c.l.bf16 %v341
  %v374 = vunpack.c.l.bf16 %v350
  %v375 = vunpack.c.l.bf16 %v359
  %v376 = vunpack.c.l.bf16 %v368
  %v377 = vadd.f32 %v369, %v373
  %v378 = vadd.f32 %v370, %v374
  %v379 = vadd.f32 %v371, %v375
  %v380 = vadd.f32 %v372, %v376
  %v381 = vpack.c.bf16 %v377, %v377
  %v382 = vpack.c.bf16 %v378, %v378
  %v383 = vpack.c.bf16 %v379, %v379
  %v384 = vpack.c.bf16 %v380, %v380
  %v385 = vunpack.c.l.bf16 %v381
  %v386 = vunpack.c.l.bf16 %v382
  %v387 = vunpack.c.l.bf16 %v383
  %v388 = vunpack.c.l.bf16 %v384
  %v389 = vmax.f32 %v385, 0.0
  %v390 = vmax.f32 %v386, 0.0
  %v391 = vmax.f32 %v387, 0.0
  %v392 = vmax.f32 %v388, 0.0
  %v393 = vpack.c.bf16 %v390, %v389
  %v394 = vpack.c.bf16 %v392, %v391
  %v395 = vld [vmem:[%s5] sm:$0xf]
  %v396 = vld [vmem:[%s5 + $0x4] sm:$0xf]
  %v397 = vld [vmem:[%s6] sm:$0xff]
  %v398 = vld [vmem:[%s6 + $0x8] sm:$0xff]
  %400 = vset.pattern.permute.xlu0 0
  %401 = vperm.xlu0 %400, %v397
  %v402 = vpop.permute.xlu0 %401
  %405 = vset.pattern.permute.xlu0 0
  %406 = vperm.xlu0 %405, %v398
  %v407 = vpop.permute.xlu0 %406
  %v411 = vunpack.c.l.b16 %v395
  %v412 = vunpack.c.l.b16 %v396
  %v413 = vpack.c.b16 %v412, %v411
  %vm414 = vcmask 261120
  %v416 = vsel %vm414, %v413, 0
  %418 = vmatpush.bf16.msra.mxu0 0
  %419 = vmatpush.bf16.msra.mxu0 0
  %420 = vmatpush.bf16.msra.mxu0 0
  %421 = vmatpush.bf16.msra.mxu0 0
  %422 = vmatpush.bf16.msra.mxu0 0
  %423 = vmatpush.bf16.msra.mxu0 0
  %424 = vmatpush.bf16.msra.mxu0 %v394
  %425 = vmatpush.bf16.msra.mxu0 %v393
  %426 = vmatmul.bf16.gmra.mxu0 %v416
  %v427 = vpop.f32.mrf.mxu0
  %v428 = vadd.f32 %v402, %v427
  %v429 = vpop.f32.mrf.mxu0
  %v430 = vadd.f32 %v407, %v429
  %431 = vdwg.mxu0
  %432 = vst [vmem:[%s7] sm:$0xff] %v428
  %433 = vst [vmem:[%s7 + $0x8] sm:$0xff] %v430
  // Predicated region
  $region30: #{tpu_custom_call.1} parent=0 // pred_check
    _
  $region31: #{tpu_custom_call.1} parent=0 // pred_check_branch
    %435 = sbr.rel (0) target = $region33
  $region32: #{tpu_custom_call.1} parent=0 // pred_region
    _
  $region33: #{tpu_custom_call.1} parent=0 // pred_fallthru
    _
  // Predicated region
  $region34: #{tpu_custom_call.1} parent=0 // pred_check
    _
  $region35: #{tpu_custom_call.1} parent=0 // pred_check_branch
    %437 = sbr.rel (0) target = $region37
  $region36: #{tpu_custom_call.1} parent=0 // pred_region
    _
  $region37: #{tpu_custom_call.1} parent=0 // pred_fallthru
    _

</llo_original>
